<compile_context>
chip_gen: v6e
topology: v6e:2x2x1
jax: 0.10.0
libtpu: 0.0.40
codegen_flags: <defaults>
</compile_context>

<pallas_src>
import functools

import jax
import jax.numpy as jnp
from jax.experimental import pallas as pl
from jax.experimental.pallas import tpu as pltpu


def _attn_pool_kernel(x_ref, w_ref, o_ref, m_sc, l_sc, acc_sc, *,
                      t_valid, t_tile, needs_mask):
    # x_ref: (Nb, Tt, Hp) block, w_ref: (1, Hp), o_ref: (Nb, Hp)
    # scratch: m_sc (Nb,1) running max, l_sc (Nb,1) running denom,
    #          acc_sc (Nb,Hp) running weighted sum  (all f32, persist over T axis)
    t = pl.program_id(1)

    @pl.when(t == 0)
    def _():
        m_sc[...] = jnp.full_like(m_sc, -jnp.inf)
        l_sc[...] = jnp.zeros_like(l_sc)
        acc_sc[...] = jnp.zeros_like(acc_sc)

    x = x_ref[...]                             # native dtype (Nb, Tt, Hp)
    w = w_ref[...].astype(x.dtype)             # (1, Hp)

    # Linear(H -> 1) logits. Bias omitted: softmax is shift-invariant, so the
    # scalar bias cannot change the output.  VPU multiply + lane reduce, f32 acc.
    scores = jnp.sum(x * w[None, :, :], axis=-1, dtype=jnp.float32)   # (Nb, Tt)

    if needs_mask:
        # Time steps past the true sequence length (T padded to a tile multiple)
        # must not contribute to the softmax.
        tpos = t * t_tile + jax.lax.broadcasted_iota(jnp.int32, scores.shape, 1)
        scores = jnp.where(tpos < t_valid, scores, -jnp.inf)

    # Online (streaming) softmax update across the T grid axis.
    m_prev = m_sc[...]                                                 # (Nb, 1)
    m_new = jnp.maximum(m_prev, jnp.max(scores, axis=-1, keepdims=True))
    alpha = jnp.exp(m_prev - m_new)                                    # (Nb, 1)
    e = jnp.exp(scores - m_new)                                        # (Nb, Tt)

    l_sc[...] = alpha * l_sc[...] + jnp.sum(e, axis=-1, keepdims=True)

    # Weighted sum over T on the VPU (memory-bound kernel: the per-batch M=1 MXU
    # matmul wastes >=7/8 of the array).  Multiply in input dtype, accumulate f32.
    contrib = jnp.sum(x * e.astype(x.dtype)[..., None], axis=1,
                      dtype=jnp.float32)                               # (Nb, Hp)
    acc_sc[...] = alpha * acc_sc[...] + contrib
    m_sc[...] = m_new

    @pl.when(t == pl.num_programs(1) - 1)
    def _():
        denom = l_sc[...]
        # EUP approximate reciprocal + one Newton refinement (~1e-6 rel error).
        r = pl.reciprocal(denom, approx=True)
        r = r * (2.0 - denom * r)
        o_ref[...] = (acc_sc[...] * r).astype(o_ref.dtype)


def _round_up(x, m):
    return pl.cdiv(x, m) * m


def _vmem_limit_bytes():
    """Generation-aware VMEM limit: ~3/4 of physical, capped, with headroom."""
    try:
        cap = int(pltpu.get_tpu_info().vmem_capacity_bytes)
    except Exception:
        cap = 128 << 20
    # 128 MiB (v5e/v6e) -> 96 MiB; 64 MiB (v7x, per TC) -> 48 MiB.
    return max(32 << 20, min(cap * 3 // 4, 112 << 20))


def _choose_t_tile(T, Hp, bytes_per, per_buffer_budget):
    """Full T if a (8, T, Hp) slab fits the per-buffer budget, else a multiple of 8."""
    if 8 * T * Hp * bytes_per <= per_buffer_budget:
        return T                       # full-T block: no T padding / masking needed
    tt = per_buffer_budget // (8 * Hp * bytes_per)
    tt = max(8, (int(tt) // 8) * 8)
    return int(min(tt, _round_up(T, 8)))


def _choose_block_n(N, Tt, Hp, bytes_per, per_buffer_budget):
    """Batch block: multiple of 8, sized by the VMEM budget, >=2 grid steps if possible."""
    per_row = max(Tt * Hp * bytes_per, 1)
    bn = per_buffer_budget // per_row
    bn = int(max(8, min(bn, 4096)))
    bn = (bn // 8) * 8
    if N > 8:
        # Keep at least 2 batch grid steps so v7x's 2 TensorCores both get work.
        bn = min(bn, _round_up(pl.cdiv(N, 2), 8))
    bn = min(bn, _round_up(N, 8))      # don't over-pad tiny batches
    return max(bn, 8)


def self_attention_pooling(batch_rep, w, b=None, *, block_n=None, t_tile=None):
    """batch_rep: (N, T, H); w: (1, H); b: (1,) (unused: softmax shift-invariant).

    Returns (N, H) in batch_rep.dtype, matching SelfAttentionPooling.forward.
    """
    N, T, H = batch_rep.shape
    in_dtype = batch_rep.dtype
    itemsize = jnp.dtype(in_dtype).itemsize
    bytes_per = max(itemsize, 4)       # budget in f32-equivalent bytes (v5e casts)

    Hp = _round_up(H, 128)             # lane-dense hidden dim (zero cols harmless)

    vmem_limit = _vmem_limit_bytes()
    # x slabs are double-buffered -> give them ~70% of the limit, rest for
    # output/weight/scratch/compiler headroom.
    per_buffer_budget = int(vmem_limit * 0.35)

    if t_tile is None:
        t_tile = _choose_t_tile(T, Hp, bytes_per, per_buffer_budget)
    Tt = int(t_tile)
    Tp = _round_up(T, Tt)

    if block_n is None:
        block_n = _choose_block_n(N, Tt, Hp, bytes_per, per_buffer_budget)
    block_n = int(block_n)
    Np = _round_up(N, block_n)

    x = batch_rep
    if (Np != N) or (Tp != T) or (Hp != H):
        x = jnp.pad(x, ((0, Np - N), (0, Tp - T), (0, Hp - H)))

    w2 = w.reshape(1, H).astype(jnp.float32)
    if Hp != H:
        w2 = jnp.pad(w2, ((0, 0), (0, Hp - H)))

    kernel = functools.partial(_attn_pool_kernel, t_valid=T, t_tile=Tt,
                               needs_mask=(Tp != T))

    cost = pl.CostEstimate(
        flops=int(4 * N * T * H),            # score dot + weighted sum
        transcendentals=int(2 * N * T),      # exp(scores), exp(alpha)
        bytes_accessed=int(N * Tp * Hp * itemsize + N * Hp * itemsize + Hp * 4),
    )

    out = pl.pallas_call(
        kernel,
        out_shape=jax.ShapeDtypeStruct((Np, Hp), in_dtype),
        grid_spec=pltpu.PrefetchScalarGridSpec(
            num_scalar_prefetch=0,
            grid=(Np // block_n, Tp // Tt),
            in_specs=[
                pl.BlockSpec((block_n, Tt, Hp), lambda i, t: (i, t, 0)),  # x slab
                pl.BlockSpec((1, Hp), lambda i, t: (0, 0)),               # weight
            ],
            out_specs=pl.BlockSpec((block_n, Hp), lambda i, t: (i, 0)),   # dense out
            scratch_shapes=[
                pltpu.VMEM((block_n, 1), jnp.float32),    # running max m
                pltpu.VMEM((block_n, 1), jnp.float32),    # running denom l
                pltpu.VMEM((block_n, Hp), jnp.float32),   # running weighted sum
            ],
        ),
        compiler_params=pltpu.CompilerParams(
            dimension_semantics=("parallel", "arbitrary"),
            vmem_limit_bytes=int(vmem_limit),
        ),
        cost_estimate=cost,
    )(x, w2)

    return out[:N, :H]


def _reference(batch_rep, w, b):
    # Pure-JAX reference matching the PyTorch forward (bias included).
    x = batch_rep.astype(jnp.float32)
    scores = jnp.einsum("nth,oh->nto", x, w.astype(jnp.float32)) + b   # (N, T, 1)
    att = jax.nn.softmax(scores[..., 0], axis=1)[..., None]            # (N, T, 1)
    return jnp.sum(x * att, axis=1)                                    # (N, H)


if __name__ == "__main__":
    key = jax.random.PRNGKey(0)
    k_x, k_w, k_b, k_x2 = jax.random.split(key, 4)

    # --- main check: small shapes, single (batch, T) tile ---
    N, T, H = 2, 8, 32                      # N: batch, T: seq len, H: hidden dim
    batch_rep = jax.random.normal(k_x, (N, T, H), dtype=jnp.float32)

    # nn.Linear(H, 1): weight (1, H), bias (1,) — deterministic synthetic init
    w = jax.random.normal(k_w, (1, H), dtype=jnp.float32) * 0.1
    b = jax.random.normal(k_b, (1,), dtype=jnp.float32) * 0.1

    out = jax.block_until_ready(self_attention_pooling(batch_rep, w, b))
    ref = _reference(batch_rep, w, b)
    assert out.shape == (N, H)
    assert jnp.allclose(out, ref, atol=1e-5, rtol=1e-5)

    # --- second check: exercise the T-tiled online-softmax path with masking ---
    T2 = 20                                 # not a multiple of the forced t_tile=8
    batch_rep2 = jax.random.normal(k_x2, (N, T2, H), dtype=jnp.float32)
    out2 = jax.block_until_ready(
        self_attention_pooling(batch_rep2, w, b, block_n=8, t_tile=8))
    ref2 = _reference(batch_rep2, w, b)
    assert out2.shape == (N, H)
    assert jnp.allclose(out2, ref2, atol=1e-5, rtol=1e-5)

    print("KERNEL_OK")
</pallas_src>

<mosaic_0001>
module attributes {stable_mosaic.version = 11 : i64} {
  func.func @_attn_pool_kernel(%arg0: i32, %arg1: i32, %arg2: memref<8x8x128xf32, #tpu.memory_space<vmem>>, %arg3: memref<1x128xf32, #tpu.memory_space<vmem>>, %arg4: memref<8x128xf32, #tpu.memory_space<vmem>>, %arg5: memref<8x1xf32, #tpu.memory_space<vmem>>, %arg6: memref<8x1xf32, #tpu.memory_space<vmem>>, %arg7: memref<8x128xf32, #tpu.memory_space<vmem>>) attributes {dimension_semantics = [#tpu.dimension_semantics<parallel>, #tpu.dimension_semantics<arbitrary>], iteration_bounds = array<i64: 1, 1>, scalar_prefetch = 0 : i64, scratch_operands = 3 : i64, tpu.core_type = #tpu.core_type<tc>, window_params = [{transform_indices = @transform_0, window_bounds = array<i64: 8, 8, 128>}, {pipeline_mode = #tpu.pipeline_mode<synchronous>, transform_indices = @transform_1, window_bounds = array<i64: 1, 128>}, {transform_indices = @transform_2, window_bounds = array<i64: 8, 128>}]} {
    %c0_i32 = arith.constant 0 : i32
    %0 = arith.cmpi eq, %arg1, %c0_i32 : i32
    %1 = arith.extui %0 : i1 to i32
    %c0_i32_0 = arith.constant 0 : i32
    %2 = arith.cmpi ne, %1, %c0_i32_0 : i32
    scf.if %2 {
      %cst_22 = arith.constant 0xFF800000 : f32
      %37 = vector.broadcast %cst_22 : f32 to vector<8x1xf32>
      %c0_23 = arith.constant 0 : index
      %c0_24 = arith.constant 0 : index
      %38 = vector.load %arg5[%c0_23, %c0_24] : memref<8x1xf32, #tpu.memory_space<vmem>>, vector<8x1xf32>
      tpu.vector_store %arg5[%c0_23, %c0_24], %37 {strides = array<i32>} : memref<8x1xf32, #tpu.memory_space<vmem>>, vector<8x1xf32>,
      %cst_25 = arith.constant 0.000000e+00 : f32
      %39 = vector.broadcast %cst_25 : f32 to vector<8x1xf32>
      %c0_26 = arith.constant 0 : index
      %c0_27 = arith.constant 0 : index
      %40 = vector.load %arg6[%c0_26, %c0_27] : memref<8x1xf32, #tpu.memory_space<vmem>>, vector<8x1xf32>
      tpu.vector_store %arg6[%c0_26, %c0_27], %39 {strides = array<i32>} : memref<8x1xf32, #tpu.memory_space<vmem>>, vector<8x1xf32>,
      %cst_28 = arith.constant 0.000000e+00 : f32
      %41 = vector.broadcast %cst_28 : f32 to vector<8x128xf32>
      %c0_29 = arith.constant 0 : index
      %c0_30 = arith.constant 0 : index
      %42 = vector.load %arg7[%c0_29, %c0_30] : memref<8x128xf32, #tpu.memory_space<vmem>>, vector<8x128xf32>
      tpu.vector_store %arg7[%c0_29, %c0_30], %41 {strides = array<i32>} : memref<8x128xf32, #tpu.memory_space<vmem>>, vector<8x128xf32>,
    } else {
    }
    %c0 = arith.constant 0 : index
    %c0_1 = arith.constant 0 : index
    %c0_2 = arith.constant 0 : index
    %3 = vector.load %arg2[%c0, %c0_1, %c0_2] : memref<8x8x128xf32, #tpu.memory_space<vmem>>, vector<8x8x128xf32>
    %c0_3 = arith.constant 0 : index
    %c0_4 = arith.constant 0 : index
    %4 = vector.load %arg3[%c0_3, %c0_4] : memref<1x128xf32, #tpu.memory_space<vmem>>, vector<1x128xf32>
    %5 = vector.shape_cast %4 : vector<1x128xf32> to vector<1x1x128xf32>
    %6 = vector.broadcast %5 : vector<1x1x128xf32> to vector<8x8x128xf32>
    %7 = arith.mulf %3, %6 : vector<8x8x128xf32>
    %cst = arith.constant dense<0.000000e+00> : vector<8x8xf32>
    %8 = vector.multi_reduction <add>, %7, %cst [2] : vector<8x8x128xf32> to vector<8x8xf32>
    %c0_5 = arith.constant 0 : index
    %c0_6 = arith.constant 0 : index
    %9 = vector.load %arg5[%c0_5, %c0_6] : memref<8x1xf32, #tpu.memory_space<vmem>>, vector<8x1xf32>
    %cst_7 = arith.constant dense<0xFF800000> : vector<8xf32>
    %10 = vector.multi_reduction <maximumf>, %8, %cst_7 [1] : vector<8x8xf32> to vector<8xf32>
    %11 = vector.shape_cast %10 : vector<8xf32> to vector<8x1xf32>
    %12 = arith.maximumf %9, %11 : vector<8x1xf32>
    %13 = arith.subf %9, %12 : vector<8x1xf32>
    %14 = math.exp %13 : vector<8x1xf32>
    %15 = vector.broadcast %12 : vector<8x1xf32> to vector<8x8xf32>
    %16 = arith.subf %8, %15 : vector<8x8xf32>
    %17 = math.exp %16 : vector<8x8xf32>
    %c0_8 = arith.constant 0 : index
    %c0_9 = arith.constant 0 : index
    %18 = vector.load %arg6[%c0_8, %c0_9] : memref<8x1xf32, #tpu.memory_space<vmem>>, vector<8x1xf32>
    %19 = arith.mulf %14, %18 : vector<8x1xf32>
    %cst_10 = arith.constant dense<0.000000e+00> : vector<8xf32>
    %20 = vector.multi_reduction <add>, %17, %cst_10 [1] : vector<8x8xf32> to vector<8xf32>
    %21 = vector.shape_cast %20 : vector<8xf32> to vector<8x1xf32>
    %22 = arith.addf %19, %21 : vector<8x1xf32>
    %c0_11 = arith.constant 0 : index
    %c0_12 = arith.constant 0 : index
    %23 = vector.load %arg6[%c0_11, %c0_12] : memref<8x1xf32, #tpu.memory_space<vmem>>, vector<8x1xf32>
    tpu.vector_store %arg6[%c0_11, %c0_12], %22 {strides = array<i32>} : memref<8x1xf32, #tpu.memory_space<vmem>>, vector<8x1xf32>,
    %24 = vector.shape_cast %17 : vector<8x8xf32> to vector<8x8x1xf32>
    %25 = vector.broadcast %24 : vector<8x8x1xf32> to vector<8x8x128xf32>
    %26 = arith.mulf %3, %25 : vector<8x8x128xf32>
    %cst_13 = arith.constant dense<0.000000e+00> : vector<8x128xf32>
    %27 = vector.multi_reduction <add>, %26, %cst_13 [1] : vector<8x8x128xf32> to vector<8x128xf32>
    %c0_14 = arith.constant 0 : index
    %c0_15 = arith.constant 0 : index
    %28 = vector.load %arg7[%c0_14, %c0_15] : memref<8x128xf32, #tpu.memory_space<vmem>>, vector<8x128xf32>
    %29 = vector.broadcast %14 : vector<8x1xf32> to vector<8x128xf32>
    %30 = arith.mulf %29, %28 : vector<8x128xf32>
    %31 = arith.addf %30, %27 : vector<8x128xf32>
    %c0_16 = arith.constant 0 : index
    %c0_17 = arith.constant 0 : index
    %32 = vector.load %arg7[%c0_16, %c0_17] : memref<8x128xf32, #tpu.memory_space<vmem>>, vector<8x128xf32>
    tpu.vector_store %arg7[%c0_16, %c0_17], %31 {strides = array<i32>} : memref<8x128xf32, #tpu.memory_space<vmem>>, vector<8x128xf32>,
    %c0_18 = arith.constant 0 : index
    %c0_19 = arith.constant 0 : index
    %33 = vector.load %arg5[%c0_18, %c0_19] : memref<8x1xf32, #tpu.memory_space<vmem>>, vector<8x1xf32>
    tpu.vector_store %arg5[%c0_18, %c0_19], %12 {strides = array<i32>} : memref<8x1xf32, #tpu.memory_space<vmem>>, vector<8x1xf32>,
    %c0_i32_20 = arith.constant 0 : i32
    %34 = arith.cmpi eq, %arg1, %c0_i32_20 : i32
    %35 = arith.extui %34 : i1 to i32
    %c0_i32_21 = arith.constant 0 : i32
    %36 = arith.cmpi ne, %35, %c0_i32_21 : i32
    scf.if %36 {
      %c0_22 = arith.constant 0 : index
      %c0_23 = arith.constant 0 : index
      %37 = vector.load %arg6[%c0_22, %c0_23] : memref<8x1xf32, #tpu.memory_space<vmem>>, vector<8x1xf32>
      %38 = tpu.reciprocal %37 {approx = true} : vector<8x1xf32> -> vector<8x1xf32>
      %39 = arith.mulf %37, %38 : vector<8x1xf32>
      %cst_24 = arith.constant 2.000000e+00 : f32
      %40 = vector.broadcast %cst_24 : f32 to vector<8x1xf32>
      %41 = arith.subf %40, %39 : vector<8x1xf32>
      %42 = arith.mulf %38, %41 : vector<8x1xf32>
      %c0_25 = arith.constant 0 : index
      %c0_26 = arith.constant 0 : index
      %43 = vector.load %arg7[%c0_25, %c0_26] : memref<8x128xf32, #tpu.memory_space<vmem>>, vector<8x128xf32>
      %44 = vector.broadcast %42 : vector<8x1xf32> to vector<8x128xf32>
      %45 = arith.mulf %43, %44 : vector<8x128xf32>
      %c0_27 = arith.constant 0 : index
      %c0_28 = arith.constant 0 : index
      %46 = vector.load %arg4[%c0_27, %c0_28] : memref<8x128xf32, #tpu.memory_space<vmem>>, vector<8x128xf32>
      tpu.vector_store %arg4[%c0_27, %c0_28], %45 {strides = array<i32>} : memref<8x128xf32, #tpu.memory_space<vmem>>, vector<8x128xf32>,
    } else {
    }
    return
  }
  func.func @transform_0(%arg0: i32, %arg1: i32) -> (i32, i32, i32) {
    %c0_i32 = arith.constant 0 : i32
    %c0_i32_0 = arith.constant 0 : i32
    return %arg0, %arg1, %c0_i32 : i32, i32, i32
  }
  func.func @transform_1(%arg0: i32, %arg1: i32) -> (i32, i32) {
    %c0_i32 = arith.constant 0 : i32
    %c0_i32_0 = arith.constant 0 : i32
    %c0_i32_1 = arith.constant 0 : i32
    return %c0_i32, %c0_i32_0 : i32, i32
  }
  func.func @transform_2(%arg0: i32, %arg1: i32) -> (i32, i32) {
    %c0_i32 = arith.constant 0 : i32
    %c0_i32_0 = arith.constant 0 : i32
    return %arg0, %c0_i32 : i32, i32
  }
}

</mosaic_0001>

<llo_original>
// kernel: tpu_custom_call.1
$region0: #{tpu_custom_call.1}
  #allocation0 [shape = 'u32[]', space=smem, size = 0x4, offset = 0x4, fixed_abs, tag = 'smem constant byte address 0x4 - core index']
  #allocation1 [shape = 'u32[144,128]{1,0:T(1,128)}', space=vmem, size = 0x12000, scoped, tag = 'internal scratch']
  #allocation2 [shape = 'f32[8,1]{1,0:T(8,128)}', space=vmem, size = 0x1000, scoped, tag = 'scratch operand']
  #allocation3 [shape = 'f32[8,1]{1,0:T(8,128)}', space=vmem, size = 0x1000, scoped, tag = 'scratch operand']
  #allocation4 [shape = 'f32[8,128]{1,0:T(8,128)}', space=vmem, size = 0x1000, scoped, tag = 'scratch operand']
  %s0 = inlined_call_operand.hbm [shape: f32[8,8,128], index: 0, kind: input, shape index: {}]
  %s1 = inlined_call_operand.vmem [shape: f32[1,128], index: 1, kind: input, shape index: {}]
  %s2 = inlined_call_operand.hbm [shape: f32[8,128], index: 2, kind: output, shape index: {}]
  %s3 = sld [smem:[#allocation0]]
  $region30: #{tpu_custom_call.1} parent=0
    _
  %s5 = ssub.s32 1, %s3
  %s6 = scalar_select 0, %s5, %s3
  $region1: #{tpu_custom_call.1} parent=0
    #allocation5 [shape = 'u8[32768]{0}', space=vmem, size = 0x8000, scoped, tag = 'input window, operand 0, single buffered']
    #allocation6 [shape = 's32[1]{0}', space=sflag, size = 0x4, scoped, tag = 'scoped memory for tpu_custom_call.1']
    #allocation7 [shape = 's32[1]{0}', space=sflag, size = 0x4, scoped, tag = 'scoped memory for tpu_custom_call.1']
    #allocation8 [shape = 'u8[4096]{0}', space=vmem, size = 0x1000, scoped, tag = 'output window, operand 0, single buffered']
    %7 = vsyncpa [#allocation6], 0
    %8 = vsyncpa [#allocation7], 0
    // Predicated region
    $region2: #{tpu_custom_call.1} parent=1 // pred_check
      _
    $region3: #{tpu_custom_call.1} parent=1 // pred_check_branch
      %10 = sbr.rel (0) target = $region5
    $region4: #{tpu_custom_call.1} parent=1 // pred_region
      %s12 = ssub.s32 1024, 1024
      %13 = vsyncadd [#allocation6], %s12
      %s14 = sshll.u32 [#allocation5], 4
      %s15 = int_to_ptr.vmem [resolvable:$true] %s14
      %20 = dma.hbm_to_vmem [thread:$0]  %s0, 1024, %s15, [#allocation6], 128, 128, 8
    $region5: #{tpu_custom_call.1} parent=1 // pred_fallthru
      _
    // Predicated region
    $region6: #{tpu_custom_call.1} parent=1 // pred_check
      _
    $region7: #{tpu_custom_call.1} parent=1 // pred_check_branch
      %22 = sbr.rel (0) target = $region9
    $region8: #{tpu_custom_call.1} parent=1 // pred_region
      _
    $region9: #{tpu_custom_call.1} parent=1 // pred_fallthru
      _
    // Predicated region
    $region10: #{tpu_custom_call.1} parent=1 // pred_check
      _
    $region11: #{tpu_custom_call.1} parent=1 // pred_check_branch
      %24 = sbr.rel (0) target = $region13
    $region12: #{tpu_custom_call.1} parent=1 // pred_region
      %25 = dma.done [#allocation6], 1024
    $region13: #{tpu_custom_call.1} parent=1 // pred_fallthru
      _
    %p26 = scmp.eq.s32.totalorder 0, 0
    // Predicated region
    $region14: #{tpu_custom_call.1} parent=1 // pred_check
      %p27 = pneg %p26
    $region15: #{tpu_custom_call.1} parent=1 // pred_check_branch
      %29 = sbr.rel (%p27) target = $region17
    $region16: #{tpu_custom_call.1} parent=1 // pred_region
      %vm30 = vcmask 7168
      %31 = vst.msk [vmem:[#allocation2] sm:$0xff] %vm30, -inf
      %32 = vst.msk [vmem:[#allocation3] sm:$0xff] %vm30, 0.0
      %33 = vst [vmem:[#allocation4] sm:$0xff] 0.0
    $region17: #{tpu_custom_call.1} parent=1 // pred_fallthru
      _
    %v34 = vld [vmem:[#allocation5] sm:$0xff]
    %v35 = vld [vmem:[#allocation5 + $0x8] sm:$0xff]
    %v36 = vld [vmem:[#allocation5 + $0x10] sm:$0xff]
    %v37 = vld [vmem:[#allocation5 + $0x18] sm:$0xff]
    %v38 = vld [vmem:[#allocation5 + $0x20] sm:$0xff]
    %v39 = vld [vmem:[#allocation5 + $0x28] sm:$0xff]
    %v40 = vld [vmem:[#allocation5 + $0x30] sm:$0xff]
    %v41 = vld [vmem:[#allocation5 + $0x38] sm:$0xff]
    %v42 = vld [vmem:[%s1] sm:$0x1]
    %v44 = vlaneseq
    %v45 = vshrl.u32 %v44, 7
    %v46 = vsub.s32 0, %v45
    %v47 = vrot.slane %v42, %v46
    %v49 = vmul.f32 %v34, %v47
    %v50 = vmul.f32 %v35, %v47
    %v51 = vmul.f32 %v36, %v47
    %v52 = vmul.f32 %v37, %v47
    %v53 = vmul.f32 %v38, %v47
    %v54 = vmul.f32 %v39, %v47
    %v55 = vmul.f32 %v40, %v47
    %v56 = vmul.f32 %v41, %v47
    %57 = vadd.xlane.f32.xlu0 %v49
    %v58 = vpop.xlane.xlu0 %57
    %59 = vadd.xlane.f32.xlu0 %v50
    %v60 = vpop.xlane.xlu0 %59
    %61 = vadd.xlane.f32.xlu0 %v51
    %v62 = vpop.xlane.xlu0 %61
    %63 = vadd.xlane.f32.xlu0 %v52
    %v64 = vpop.xlane.xlu0 %63
    %65 = vadd.xlane.f32.xlu0 %v53
    %v66 = vpop.xlane.xlu0 %65
    %67 = vadd.xlane.f32.xlu0 %v54
    %v68 = vpop.xlane.xlu0 %67
    %69 = vadd.xlane.f32.xlu0 %v55
    %v70 = vpop.xlane.xlu0 %69
    %71 = vadd.xlane.f32.xlu0 %v56
    %v72 = vpop.xlane.xlu0 %71
    %v73 = vld [vmem:[#allocation2] sm:$0xff]
    %v82 = vlaneseq
    %v83 = vand.u32 %v82, 127
    %v84 = vlaneseq
    %v85 = vshrl.u32 %v84, 7
    %v86 = vsub.s32 %v83, %v85
    %v87 = vrot.slane %v58, %v86
    %v88 = vlaneseq
    %v89 = vshrl.u32 %v88, 7
    %v90 = vsub.s32 %v83, %v89
    %v91 = vrot.slane %v60, %v90
    %v92 = vlaneseq
    %v93 = vshrl.u32 %v92, 7
    %v94 = vsub.s32 %v83, %v93
    %v95 = vrot.slane %v62, %v94
    %v96 = vlaneseq
    %v97 = vshrl.u32 %v96, 7
    %v98 = vsub.s32 %v83, %v97
    %v99 = vrot.slane %v64, %v98
    %v100 = vlaneseq
    %v101 = vshrl.u32 %v100, 7
    %v102 = vsub.s32 %v83, %v101
    %v103 = vrot.slane %v66, %v102
    %v104 = vlaneseq
    %v105 = vshrl.u32 %v104, 7
    %v106 = vsub.s32 %v83, %v105
    %v107 = vrot.slane %v68, %v106
    %v108 = vlaneseq
    %v109 = vshrl.u32 %v108, 7
    %v110 = vsub.s32 %v83, %v109
    %v111 = vrot.slane %v70, %v110
    %v112 = vlaneseq
    %v113 = vshrl.u32 %v112, 7
    %v114 = vsub.s32 %v83, %v113
    %v115 = vrot.slane %v72, %v114
    %vm116 = vcmask 1041409
    %v117 = vsel %vm116, %v91, %v87
    %vm118 = vcmask 1042434
    %v119 = vsel %vm118, %v95, %v117
    %vm120 = vcmask 1043459
    %v121 = vsel %vm120, %v99, %v119
    %vm122 = vcmask 1044484
    %v123 = vsel %vm122, %v103, %v121
    %vm124 = vcmask 1045509
    %v125 = vsel %vm124, %v107, %v123
    %vm126 = vcmask 1046534
    %v127 = vsel %vm126, %v111, %v125
    %vm128 = vcmask 1047559
    %v129 = vsel %vm128, %v115, %v127
    %vm131 = vcmask 64512
    %v132 = vsel %vm131, %v129, -inf
    %133 = vmax.xlane.f32.xlu0 %v132
    %v134 = vpop.xlane.xlu0 %133
    %v135 = vmax.f32 %v73, %v134
    %v136 = vsub.f32 %v73, %v135
    %v137 = vmul.f32 %v136, 1.442695
    %v138 = vpow.pop %v137
    %140 = vset.pattern.permute.xlu0 0
    %141 = vperm.xlu0 %140, %v135
    %v142 = vpop.permute.xlu0 %141
    %v143 = vlaneseq
    %v144 = vshrl.u32 %v143, 7
    %v145 = vsub.s32 0, %v144
    %v146 = vrot.slane %v142, %v145
    %v147 = vlaneseq
    %v148 = vshrl.u32 %v147, 7
    %v149 = vsub.s32 1, %v148
    %v150 = vrot.slane %v142, %v149
    %v151 = vlaneseq
    %v152 = vshrl.u32 %v151, 7
    %v153 = vsub.s32 2, %v152
    %v154 = vrot.slane %v142, %v153
    %v155 = vlaneseq
    %v156 = vshrl.u32 %v155, 7
    %v157 = vsub.s32 3, %v156
    %v158 = vrot.slane %v142, %v157
    %v159 = vlaneseq
    %v160 = vshrl.u32 %v159, 7
    %v161 = vsub.s32 4, %v160
    %v162 = vrot.slane %v142, %v161
    %v163 = vlaneseq
    %v164 = vshrl.u32 %v163, 7
    %v165 = vsub.s32 5, %v164
    %v166 = vrot.slane %v142, %v165
    %v167 = vlaneseq
    %v168 = vshrl.u32 %v167, 7
    %v169 = vsub.s32 6, %v168
    %v170 = vrot.slane %v142, %v169
    %v171 = vlaneseq
    %v172 = vshrl.u32 %v171, 7
    %v173 = vsub.s32 7, %v172
    %v174 = vrot.slane %v142, %v173
    %v183 = vsub.f32 %v58, %v146
    %v184 = vsub.f32 %v60, %v150
    %v185 = vsub.f32 %v62, %v154
    %v186 = vsub.f32 %v64, %v158
    %v187 = vsub.f32 %v66, %v162
    %v188 = vsub.f32 %v68, %v166
    %v189 = vsub.f32 %v70, %v170
    %v190 = vsub.f32 %v72, %v174
    %v191 = vmul.f32 %v183, 1.442695
    %v192 = vpow.pop %v191
    %v193 = vmul.f32 %v184, 1.442695
    %v194 = vpow.pop %v193
    %v195 = vmul.f32 %v185, 1.442695
    %v196 = vpow.pop %v195
    %v197 = vmul.f32 %v186, 1.442695
    %v198 = vpow.pop %v197
    %v199 = vmul.f32 %v187, 1.442695
    %v200 = vpow.pop %v199
    %v201 = vmul.f32 %v188, 1.442695
    %v202 = vpow.pop %v201
    %v203 = vmul.f32 %v189, 1.442695
    %v204 = vpow.pop %v203
    %v205 = vmul.f32 %v190, 1.442695
    %v206 = vpow.pop %v205
    %v207 = vld [vmem:[#allocation3] sm:$0xff]
    %v208 = vmul.f32 %v138, %v207
    %217 = vset.pattern.permute.xlu0 0
    %218 = vperm.xlu0 %217, %v192
    %v219 = vpop.permute.xlu0 %218
    %220 = vset.pattern.permute.xlu0 0
    %221 = vperm.xlu0 %220, %v194
    %v222 = vpop.permute.xlu0 %221
    %223 = vset.pattern.permute.xlu0 0
    %224 = vperm.xlu0 %223, %v196
    %v225 = vpop.permute.xlu0 %224
    %226 = vset.pattern.permute.xlu0 0
    %227 = vperm.xlu0 %226, %v198
    %v228 = vpop.permute.xlu0 %227
    %229 = vset.pattern.permute.xlu0 0
    %230 = vperm.xlu0 %229, %v200
    %v231 = vpop.permute.xlu0 %230
    %232 = vset.pattern.permute.xlu0 0
    %233 = vperm.xlu0 %232, %v202
    %v234 = vpop.permute.xlu0 %233
    %235 = vset.pattern.permute.xlu0 0
    %236 = vperm.xlu0 %235, %v204
    %v237 = vpop.permute.xlu0 %236
    %238 = vset.pattern.permute.xlu0 0
    %239 = vperm.xlu0 %238, %v206
    %v240 = vpop.permute.xlu0 %239
    %v241 = vlaneseq
    %v242 = vshrl.u32 %v241, 7
    %v243 = vsub.s32 %v83, %v242
    %v244 = vrot.slane %v219, %v243
    %v245 = vlaneseq
    %v246 = vshrl.u32 %v245, 7
    %v247 = vsub.s32 %v83, %v246
    %v248 = vrot.slane %v222, %v247
    %v249 = vlaneseq
    %v250 = vshrl.u32 %v249, 7
    %v251 = vsub.s32 %v83, %v250
    %v252 = vrot.slane %v225, %v251
    %v253 = vlaneseq
    %v254 = vshrl.u32 %v253, 7
    %v255 = vsub.s32 %v83, %v254
    %v256 = vrot.slane %v228, %v255
    %v257 = vlaneseq
    %v258 = vshrl.u32 %v257, 7
    %v259 = vsub.s32 %v83, %v258
    %v260 = vrot.slane %v231, %v259
    %v261 = vlaneseq
    %v262 = vshrl.u32 %v261, 7
    %v263 = vsub.s32 %v83, %v262
    %v264 = vrot.slane %v234, %v263
    %v265 = vlaneseq
    %v266 = vshrl.u32 %v265, 7
    %v267 = vsub.s32 %v83, %v266
    %v268 = vrot.slane %v237, %v267
    %v269 = vlaneseq
    %v270 = vshrl.u32 %v269, 7
    %v271 = vsub.s32 %v83, %v270
    %v272 = vrot.slane %v240, %v271
    %v273 = vsel %vm116, %v248, %v244
    %v274 = vsel %vm118, %v252, %v273
    %v275 = vsel %vm120, %v256, %v274
    %v276 = vsel %vm122, %v260, %v275
    %v277 = vsel %vm124, %v264, %v276
    %v278 = vsel %vm126, %v268, %v277
    %v279 = vsel %vm128, %v272, %v278
    %v281 = vsel %vm131, %v279, 0.0
    %282 = vadd.xlane.f32.xlu0 %v281
    %v283 = vpop.xlane.xlu0 %282
    %v284 = vadd.f32 %v208, %v283
    %vm285 = vcmask 7168
    %286 = vst.msk [vmem:[#allocation3] sm:$0xff] %vm285, %v284
    %v295 = vmul.f32 %v34, %v219
    %v296 = vmul.f32 %v35, %v222
    %v297 = vmul.f32 %v36, %v225
    %v298 = vmul.f32 %v37, %v228
    %v299 = vmul.f32 %v38, %v231
    %v300 = vmul.f32 %v39, %v234
    %v301 = vmul.f32 %v40, %v237
    %v302 = vmul.f32 %v41, %v240
    %v303 = vrot.slane %v295, 4
    %v304 = vadd.f32 %v295, %v303
    %v305 = vrot.slane %v304, 2
    %v306 = vadd.f32 %v304, %v305
    %v307 = vrot.slane %v306, 1
    %v308 = vadd.f32 %v306, %v307
    %v309 = vrot.slane %v296, 4
    %v310 = vadd.f32 %v296, %v309
    %v311 = vrot.slane %v310, 2
    %v312 = vadd.f32 %v310, %v311
    %v313 = vrot.slane %v312, 1
    %v314 = vadd.f32 %v312, %v313
    %v315 = vrot.slane %v297, 4
    %v316 = vadd.f32 %v297, %v315
    %v317 = vrot.slane %v316, 2
    %v318 = vadd.f32 %v316, %v317
    %v319 = vrot.slane %v318, 1
    %v320 = vadd.f32 %v318, %v319
    %v321 = vrot.slane %v298, 4
    %v322 = vadd.f32 %v298, %v321
    %v323 = vrot.slane %v322, 2
    %v324 = vadd.f32 %v322, %v323
    %v325 = vrot.slane %v324, 1
    %v326 = vadd.f32 %v324, %v325
    %v327 = vrot.slane %v299, 4
    %v328 = vadd.f32 %v299, %v327
    %v329 = vrot.slane %v328, 2
    %v330 = vadd.f32 %v328, %v329
    %v331 = vrot.slane %v330, 1
    %v332 = vadd.f32 %v330, %v331
    %v333 = vrot.slane %v300, 4
    %v334 = vadd.f32 %v300, %v333
    %v335 = vrot.slane %v334, 2
    %v336 = vadd.f32 %v334, %v335
    %v337 = vrot.slane %v336, 1
    %v338 = vadd.f32 %v336, %v337
    %v339 = vrot.slane %v301, 4
    %v340 = vadd.f32 %v301, %v339
    %v341 = vrot.slane %v340, 2
    %v342 = vadd.f32 %v340, %v341
    %v343 = vrot.slane %v342, 1
    %v344 = vadd.f32 %v342, %v343
    %v345 = vrot.slane %v302, 4
    %v346 = vadd.f32 %v302, %v345
    %v347 = vrot.slane %v346, 2
    %v348 = vadd.f32 %v346, %v347
    %v349 = vrot.slane %v348, 1
    %v350 = vadd.f32 %v348, %v349
    %v351 = vld [vmem:[#allocation4] sm:$0xff]
    %353 = vset.pattern.permute.xlu0 0
    %354 = vperm.xlu0 %353, %v138
    %v355 = vpop.permute.xlu0 %354
    %v357 = vmul.f32 %v355, %v351
    %v366 = vsel %vm116, %v314, %v308
    %v367 = vsel %vm118, %v320, %v366
    %v368 = vsel %vm120, %v326, %v367
    %v369 = vsel %vm122, %v332, %v368
    %v370 = vsel %vm124, %v338, %v369
    %v371 = vsel %vm126, %v344, %v370
    %v372 = vsel %vm128, %v350, %v371
    %v374 = vadd.f32 %v357, %v372
    %375 = vst [vmem:[#allocation4] sm:$0xff] %v374
    %376 = vst.msk [vmem:[#allocation2] sm:$0xff] %vm285, %v135
    // Predicated region
    $region18: #{tpu_custom_call.1} parent=1 // pred_check
      %p377 = pneg %p26
    $region19: #{tpu_custom_call.1} parent=1 // pred_check_branch
      %379 = sbr.rel (%p377) target = $region21
    $region20: #{tpu_custom_call.1} parent=1 // pred_region
      %v380 = vld [vmem:[#allocation3] sm:$0xff]
      %v381 = vrcp.pop %v380
      %v382 = vmul.f32 %v380, %v381
      %v383 = vsub.f32 2.0, %v382
      %v384 = vmul.f32 %v381, %v383
      %v385 = vld [vmem:[#allocation4] sm:$0xff]
      %387 = vset.pattern.permute.xlu0 0
      %388 = vperm.xlu0 %387, %v384
      %v389 = vpop.permute.xlu0 %388
      %v391 = vmul.f32 %v385, %v389
      %392 = vst [vmem:[#allocation8] sm:$0xff] %v391
    $region21: #{tpu_custom_call.1} parent=1 // pred_fallthru
      _
    // Predicated region
    $region22: #{tpu_custom_call.1} parent=1 // pred_check
      _
    $region23: #{tpu_custom_call.1} parent=1 // pred_check_branch
      %394 = sbr.rel (0) target = $region25
    $region24: #{tpu_custom_call.1} parent=1 // pred_region
      %s396 = ssub.s32 128, 128
      %397 = vsyncadd [#allocation7], %s396
      %s399 = sshll.u32 [#allocation8], 4
      %s400 = int_to_ptr.vmem [resolvable:$true] %s399
      %402 = dma.vmem_to_hbm [thread:$0]  %s400, 128, %s2, [#allocation7]
    $region25: #{tpu_custom_call.1} parent=1 // pred_fallthru
      _
    // Predicated region
    $region26: #{tpu_custom_call.1} parent=1 // pred_check
      _
    $region27: #{tpu_custom_call.1} parent=1 // pred_check_branch
      %404 = sbr.rel (0) target = $region29
    $region28: #{tpu_custom_call.1} parent=1 // pred_region
      %405 = dma.done [#allocation7], 128
    $region29: #{tpu_custom_call.1} parent=1 // pred_fallthru
      _
    %406 = vsyncpa [#allocation6], 1
    %407 = vsyncpa [#allocation7], 1

</llo_original>
